<compile_context>
chip_gen: v7x
topology: tpu7x:2x2x1
jax: 0.10.0
libtpu: 0.0.40
codegen_flags: <defaults>
</compile_context>

<pallas_src>
import functools

import jax
import jax.numpy as jnp
from jax.experimental import pallas as pl
from jax.experimental.pallas import tpu as pltpu


def _round_up(x, m):
    return (x + m - 1) // m * m


def _multitask_loss_kernel(x_ref, y_ref, task_ref, wx_ref, wt_ref, b_ref,
                           tw_ref, loss_ref, task_losses_ref,
                           acc_num_ref, acc_cnt_ref):
    step = pl.program_id(0)

    @pl.when(step == 0)
    def _():
        acc_num_ref[...] = jnp.zeros_like(acc_num_ref)
        acc_cnt_ref[...] = jnp.zeros_like(acc_cnt_ref)

    tile_n = x_ref.shape[0]
    k_pad = wt_ref.shape[0]
    c_pad = wx_ref.shape[1]

    y = y_ref[...]                                   # (T, 1) int32
    task = task_ref[...]                             # (T, 1) int32
    valid_f = (y >= 0).astype(jnp.float32)           # (T, 1)
    y_safe = jnp.where(y >= 0, y, 0)

    # In-kernel one-hot masks via iota compares (VPU work, no HBM bytes).
    class_iota = jax.lax.broadcasted_iota(jnp.int32, (tile_n, c_pad), 1)
    task_iota = jax.lax.broadcasted_iota(jnp.int32, (tile_n, k_pad), 1)
    y_onehot = (class_iota == y_safe).astype(jnp.float32) * valid_f   # (T, Cp)
    task_onehot = (task_iota == task).astype(x_ref.dtype)             # (T, Kp)

    # logits = x @ W_x + task_onehot @ W_task + b   (padded cols get b=-1e30)
    logits = jnp.dot(x_ref[...], wx_ref[...],
                     preferred_element_type=jnp.float32)
    logits = logits + jnp.dot(task_onehot, wt_ref[...],
                              preferred_element_type=jnp.float32)
    logits = logits + b_ref[...]                                      # (T, Cp)

    # Numerically-stable cross entropy, reduction='none', ignore_index masked.
    m = jnp.max(logits, axis=-1, keepdims=True)
    lse = m + jnp.log(jnp.sum(jnp.exp(logits - m), axis=-1, keepdims=True))
    tgt = jnp.sum(logits * y_onehot, axis=-1, keepdims=True)
    per_sample = (lse - tgt) * valid_f                                # (T, 1)

    oh_f32 = task_onehot.astype(jnp.float32)
    acc_num_ref[...] += jnp.sum(per_sample * oh_f32, axis=0, keepdims=True)
    acc_cnt_ref[...] += jnp.sum(oh_f32, axis=0, keepdims=True)

    @pl.when(step == pl.num_programs(0) - 1)
    def _():
        cnt = acc_cnt_ref[...]
        inv = jnp.where(cnt == 0.0, 0.0, 1.0 / cnt)
        task_losses = acc_num_ref[...] * inv                          # (1, Kp)
        task_losses_ref[...] = task_losses
        loss_ref[...] = jnp.sum(task_losses * tw_ref[...],
                                axis=-1, keepdims=True)


@functools.partial(jax.jit, static_argnums=(6, 7, 8, 9))
def multitask_loss(all_x, all_y, tasks, W, b, task_weights,
                   num_tasks, num_classes, tile_n=512,
                   compute_dtype=jnp.float32):
    """Returns (loss scalar, per-task losses (num_tasks,))."""
    N, D = all_x.shape
    c_pad = _round_up(num_classes, 128)
    k_pad = _round_up(num_tasks, 128)

    tile_n = min(tile_n, _round_up(N, 8))
    n_pad = _round_up(N, tile_n)
    n_tiles = n_pad // tile_n

    # ---- parameter prep (replaces format_data's concat/one-hot) -------------
    # Split W into feature / task parts so xcat never exists in HBM.
    W_x = jnp.pad(W[:D].astype(compute_dtype),
                  ((0, 0), (0, c_pad - num_classes)))                 # (D, Cp)
    W_t = jnp.pad(W[D:D + num_tasks].astype(compute_dtype),
                  ((0, k_pad - num_tasks), (0, c_pad - num_classes))) # (Kp, Cp)
    # Padded bias columns get a large negative value so exp(pad)==0 and they
    # can never win the row max.
    b_pad = jnp.full((1, c_pad), -1e30, jnp.float32)
    b_pad = b_pad.at[0, :num_classes].set(b.astype(jnp.float32))
    tw_pad = jnp.zeros((1, k_pad), jnp.float32)
    tw_pad = tw_pad.at[0, :num_tasks].set(task_weights.astype(jnp.float32))

    # ---- batch padding: pad rows are ignore_index and an out-of-range task --
    x_p = jnp.pad(all_x.astype(compute_dtype), ((0, n_pad - N), (0, 0)))
    y_p = jnp.pad(all_y.astype(jnp.int32), (0, n_pad - N),
                  constant_values=-1).reshape(n_pad, 1)
    t_p = jnp.pad(tasks.astype(jnp.int32), (0, n_pad - N),
                  constant_values=num_tasks).reshape(n_pad, 1)

    loss, task_losses = pl.pallas_call(
        _multitask_loss_kernel,
        out_shape=(jax.ShapeDtypeStruct((1, 1), jnp.float32),
                   jax.ShapeDtypeStruct((1, k_pad), jnp.float32)),
        grid=(n_tiles,),
        in_specs=[
            pl.BlockSpec((tile_n, D), lambda i: (i, 0)),      # x tile (streamed)
            pl.BlockSpec((tile_n, 1), lambda i: (i, 0)),      # labels (streamed)
            pl.BlockSpec((tile_n, 1), lambda i: (i, 0)),      # task ids
            pl.BlockSpec((D, c_pad), lambda i: (0, 0)),       # W_x (resident)
            pl.BlockSpec((k_pad, c_pad), lambda i: (0, 0)),   # W_task (resident)
            pl.BlockSpec((1, c_pad), lambda i: (0, 0)),       # bias (resident)
            pl.BlockSpec((1, k_pad), lambda i: (0, 0)),       # task weights
        ],
        out_specs=(
            pl.BlockSpec((1, 1), lambda i: (0, 0)),
            pl.BlockSpec((1, k_pad), lambda i: (0, 0)),
        ),
        scratch_shapes=[pltpu.VMEM((1, k_pad), jnp.float32),  # per-task numerator
                        pltpu.VMEM((1, k_pad), jnp.float32)], # per-task count
        compiler_params=pltpu.CompilerParams(
            dimension_semantics=("arbitrary",)),
    )(x_p, y_p, t_p, W_x, W_t, b_pad, tw_pad)

    return loss[0, 0], task_losses[0, :num_tasks]


def _reference(all_x, all_y, tasks, W, b, task_weights, num_tasks, num_classes):
    onehot = jax.nn.one_hot(tasks, num_tasks, dtype=all_x.dtype)
    xcat = jnp.concatenate([all_x, onehot], axis=-1)
    logits = xcat @ W + b
    valid = (all_y >= 0)
    y_safe = jnp.where(valid, all_y, 0)
    logp = jax.nn.log_softmax(logits, axis=-1)
    per_sample = -jnp.take_along_axis(logp, y_safe[:, None], axis=-1)[:, 0]
    per_sample = jnp.where(valid, per_sample, 0.0)
    sum_tasks = jnp.sum(onehot, axis=0)
    inv = jnp.where(sum_tasks == 0, 0.0, 1.0 / sum_tasks)
    losses = jnp.einsum('i,ik->k', per_sample, onehot) * inv
    return jnp.einsum('i,i->', losses, task_weights), losses


if __name__ == "__main__":
    key = jax.random.PRNGKey(0)
    num_tasks = 4
    per_task = 4
    N = num_tasks * per_task          # 16 samples total
    D = 32                            # feature dim
    C = 10                            # number of classes

    k_x, k_y, k_w, k_b, k_tw = jax.random.split(key, 5)

    all_x = jax.random.normal(k_x, (N, D), dtype=jnp.float32)
    all_y = jax.random.randint(k_y, (N,), 0, C, dtype=jnp.int32)
    all_y = all_y.at[3].set(-1)       # exercise ignore_index=-1
    tasks = jnp.repeat(jnp.arange(num_tasks, dtype=jnp.int32), per_task)

    # deterministic lower-model params (linear head over [x ; task_onehot])
    W = jax.random.normal(k_w, (D + num_tasks, C), dtype=jnp.float32) * 0.1
    b = jax.random.normal(k_b, (C,), dtype=jnp.float32) * 0.01
    # deterministic upper-model params (task weights, upper_var[0])
    task_weights = jax.nn.softmax(
        jax.random.normal(k_tw, (num_tasks,), dtype=jnp.float32))

    # --- single-tile path --------------------------------------------------
    loss, task_losses = multitask_loss(all_x, all_y, tasks, W, b,
                                       task_weights, num_tasks, C)
    jax.block_until_ready((loss, task_losses))

    ref_loss, ref_task_losses = _reference(all_x, all_y, tasks, W, b,
                                           task_weights, num_tasks, C)
    assert jnp.allclose(loss, ref_loss, rtol=1e-5, atol=1e-5)
    assert jnp.allclose(task_losses, ref_task_losses, rtol=1e-5, atol=1e-5)

    # --- multi-tile path (grid accumulation + batch padding) ---------------
    loss2, task_losses2 = multitask_loss(all_x, all_y, tasks, W, b,
                                         task_weights, num_tasks, C,
                                         tile_n=8)
    jax.block_until_ready((loss2, task_losses2))
    assert jnp.allclose(loss2, ref_loss, rtol=1e-5, atol=1e-5)
    assert jnp.allclose(task_losses2, ref_task_losses, rtol=1e-5, atol=1e-5)

    print("KERNEL_OK")
</pallas_src>

<mosaic_0001>
module attributes {stable_mosaic.version = 11 : i64} {
  func.func @_multitask_loss_kernel(%arg0: i32, %arg1: memref<16x32xf32, #tpu.memory_space<vmem>>, %arg2: memref<16x1xi32, #tpu.memory_space<vmem>>, %arg3: memref<16x1xi32, #tpu.memory_space<vmem>>, %arg4: memref<32x128xf32, #tpu.memory_space<vmem>>, %arg5: memref<128x128xf32, #tpu.memory_space<vmem>>, %arg6: memref<1x128xf32, #tpu.memory_space<vmem>>, %arg7: memref<1x128xf32, #tpu.memory_space<vmem>>, %arg8: memref<1x1xf32, #tpu.memory_space<vmem>>, %arg9: memref<1x128xf32, #tpu.memory_space<vmem>>, %arg10: memref<1x128xf32, #tpu.memory_space<vmem>>, %arg11: memref<1x128xf32, #tpu.memory_space<vmem>>) attributes {dimension_semantics = [#tpu.dimension_semantics<arbitrary>], iteration_bounds = array<i64: 1>, scalar_prefetch = 0 : i64, scratch_operands = 2 : i64, tpu.core_type = #tpu.core_type<tc>, window_params = [{transform_indices = @transform_0, window_bounds = array<i64: 16, 32>}, {transform_indices = @transform_1, window_bounds = array<i64: 16, 1>}, {transform_indices = @transform_2, window_bounds = array<i64: 16, 1>}, {pipeline_mode = #tpu.pipeline_mode<synchronous>, transform_indices = @transform_3, window_bounds = array<i64: 32, 128>}, {pipeline_mode = #tpu.pipeline_mode<synchronous>, transform_indices = @transform_4, window_bounds = array<i64: 128, 128>}, {pipeline_mode = #tpu.pipeline_mode<synchronous>, transform_indices = @transform_5, window_bounds = array<i64: 1, 128>}, {pipeline_mode = #tpu.pipeline_mode<synchronous>, transform_indices = @transform_6, window_bounds = array<i64: 1, 128>}, {pipeline_mode = #tpu.pipeline_mode<synchronous>, transform_indices = @transform_7, window_bounds = array<i64: 1, 1>}, {pipeline_mode = #tpu.pipeline_mode<synchronous>, transform_indices = @transform_8, window_bounds = array<i64: 1, 128>}]} {
    %c0_i32 = arith.constant 0 : i32
    %0 = arith.cmpi eq, %arg0, %c0_i32 : i32
    %1 = arith.extui %0 : i1 to i32
    %c0_i32_0 = arith.constant 0 : i32
    %2 = arith.cmpi ne, %1, %c0_i32_0 : i32
    scf.if %2 {
      %cst_31 = arith.constant 0.000000e+00 : f32
      %63 = vector.broadcast %cst_31 : f32 to vector<1x128xf32>
      %c0_32 = arith.constant 0 : index
      %c0_33 = arith.constant 0 : index
      %64 = vector.load %arg10[%c0_32, %c0_33] : memref<1x128xf32, #tpu.memory_space<vmem>>, vector<1x128xf32>
      tpu.vector_store %arg10[%c0_32, %c0_33], %63 {strides = array<i32>} : memref<1x128xf32, #tpu.memory_space<vmem>>, vector<1x128xf32>,
      %cst_34 = arith.constant 0.000000e+00 : f32
      %65 = vector.broadcast %cst_34 : f32 to vector<1x128xf32>
      %c0_35 = arith.constant 0 : index
      %c0_36 = arith.constant 0 : index
      %66 = vector.load %arg11[%c0_35, %c0_36] : memref<1x128xf32, #tpu.memory_space<vmem>>, vector<1x128xf32>
      tpu.vector_store %arg11[%c0_35, %c0_36], %65 {strides = array<i32>} : memref<1x128xf32, #tpu.memory_space<vmem>>, vector<1x128xf32>,
    } else {
    }
    %c0 = arith.constant 0 : index
    %c0_1 = arith.constant 0 : index
    %3 = vector.load %arg2[%c0, %c0_1] : memref<16x1xi32, #tpu.memory_space<vmem>>, vector<16x1xi32>
    %c0_2 = arith.constant 0 : index
    %c0_3 = arith.constant 0 : index
    %4 = vector.load %arg3[%c0_2, %c0_3] : memref<16x1xi32, #tpu.memory_space<vmem>>, vector<16x1xi32>
    %c0_i32_4 = arith.constant 0 : i32
    %5 = vector.broadcast %c0_i32_4 : i32 to vector<16x1xi32>
    %6 = arith.cmpi sge, %3, %5 : vector<16x1xi32>
    %7 = arith.extui %6 : vector<16x1xi1> to vector<16x1xi32>
    %8 = arith.sitofp %7 : vector<16x1xi32> to vector<16x1xf32>
    %c0_i32_5 = arith.constant 0 : i32
    %9 = vector.broadcast %c0_i32_5 : i32 to vector<16x1xi32>
    %10 = arith.cmpi sge, %3, %9 : vector<16x1xi32>
    %c0_i32_6 = arith.constant 0 : i32
    %11 = vector.broadcast %c0_i32_6 : i32 to vector<16x1xi32>
    %12 = arith.select %10, %3, %11 : vector<16x1xi1>, vector<16x1xi32>
    %13 = tpu.iota {dimensions = array<i32: 1>} : vector<16x128xi32>
    %14 = tpu.iota {dimensions = array<i32: 1>} : vector<16x128xi32>
    %15 = vector.broadcast %12 : vector<16x1xi32> to vector<16x128xi32>
    %16 = arith.cmpi eq, %13, %15 : vector<16x128xi32>
    %17 = arith.extui %16 : vector<16x128xi1> to vector<16x128xi32>
    %18 = arith.sitofp %17 : vector<16x128xi32> to vector<16x128xf32>
    %19 = vector.broadcast %8 : vector<16x1xf32> to vector<16x128xf32>
    %20 = arith.mulf %18, %19 : vector<16x128xf32>
    %21 = vector.broadcast %4 : vector<16x1xi32> to vector<16x128xi32>
    %22 = arith.cmpi eq, %14, %21 : vector<16x128xi32>
    %23 = arith.extui %22 : vector<16x128xi1> to vector<16x128xi32>
    %24 = arith.sitofp %23 : vector<16x128xi32> to vector<16x128xf32>
    %c0_7 = arith.constant 0 : index
    %c0_8 = arith.constant 0 : index
    %25 = vector.load %arg1[%c0_7, %c0_8] : memref<16x32xf32, #tpu.memory_space<vmem>>, vector<16x32xf32>
    %c0_9 = arith.constant 0 : index
    %c0_10 = arith.constant 0 : index
    %26 = vector.load %arg4[%c0_9, %c0_10] : memref<32x128xf32, #tpu.memory_space<vmem>>, vector<32x128xf32>
    %cst = arith.constant dense<0.000000e+00> : vector<16x128xf32>
    %27 = tpu.matmul %25, %26, %cst {dimension_numbers = #tpu.dot_dimension_numbers<[1], [0], [0], [1], [0, 0, 1, 1], [], []>} : vector<16x32xf32>, vector<32x128xf32>, vector<16x128xf32> -> vector<16x128xf32>
    %c0_11 = arith.constant 0 : index
    %c0_12 = arith.constant 0 : index
    %28 = vector.load %arg5[%c0_11, %c0_12] : memref<128x128xf32, #tpu.memory_space<vmem>>, vector<128x128xf32>
    %cst_13 = arith.constant dense<0.000000e+00> : vector<16x128xf32>
    %29 = tpu.matmul %24, %28, %cst_13 {dimension_numbers = #tpu.dot_dimension_numbers<[1], [0], [0], [1], [0, 0, 1, 1], [], []>} : vector<16x128xf32>, vector<128x128xf32>, vector<16x128xf32> -> vector<16x128xf32>
    %30 = arith.addf %27, %29 : vector<16x128xf32>
    %c0_14 = arith.constant 0 : index
    %c0_15 = arith.constant 0 : index
    %31 = vector.load %arg6[%c0_14, %c0_15] : memref<1x128xf32, #tpu.memory_space<vmem>>, vector<1x128xf32>
    %32 = vector.broadcast %31 : vector<1x128xf32> to vector<16x128xf32>
    %33 = arith.addf %30, %32 : vector<16x128xf32>
    %cst_16 = arith.constant dense<0xFF800000> : vector<16xf32>
    %34 = vector.multi_reduction <maximumf>, %33, %cst_16 [1] : vector<16x128xf32> to vector<16xf32>
    %35 = vector.shape_cast %34 : vector<16xf32> to vector<16x1xf32>
    %36 = vector.broadcast %35 : vector<16x1xf32> to vector<16x128xf32>
    %37 = arith.subf %33, %36 : vector<16x128xf32>
    %38 = math.exp %37 : vector<16x128xf32>
    %cst_17 = arith.constant dense<0.000000e+00> : vector<16xf32>
    %39 = vector.multi_reduction <add>, %38, %cst_17 [1] : vector<16x128xf32> to vector<16xf32>
    %40 = vector.shape_cast %39 : vector<16xf32> to vector<16x1xf32>
    %41 = math.log %40 : vector<16x1xf32>
    %42 = arith.addf %35, %41 : vector<16x1xf32>
    %43 = arith.mulf %33, %20 : vector<16x128xf32>
    %cst_18 = arith.constant dense<0.000000e+00> : vector<16xf32>
    %44 = vector.multi_reduction <add>, %43, %cst_18 [1] : vector<16x128xf32> to vector<16xf32>
    %45 = vector.shape_cast %44 : vector<16xf32> to vector<16x1xf32>
    %46 = arith.subf %42, %45 : vector<16x1xf32>
    %47 = arith.mulf %46, %8 : vector<16x1xf32>
    %c0_19 = arith.constant 0 : index
    %c0_20 = arith.constant 0 : index
    %48 = vector.load %arg10[%c0_19, %c0_20] : memref<1x128xf32, #tpu.memory_space<vmem>>, vector<1x128xf32>
    %49 = vector.broadcast %47 : vector<16x1xf32> to vector<16x128xf32>
    %50 = arith.mulf %49, %24 : vector<16x128xf32>
    %cst_21 = arith.constant dense<0.000000e+00> : vector<128xf32>
    %51 = vector.multi_reduction <add>, %50, %cst_21 [0] : vector<16x128xf32> to vector<128xf32>
    %52 = vector.shape_cast %51 : vector<128xf32> to vector<1x128xf32>
    %53 = arith.addf %48, %52 : vector<1x128xf32>
    %c0_22 = arith.constant 0 : index
    %c0_23 = arith.constant 0 : index
    %54 = vector.load %arg10[%c0_22, %c0_23] : memref<1x128xf32, #tpu.memory_space<vmem>>, vector<1x128xf32>
    tpu.vector_store %arg10[%c0_22, %c0_23], %53 {strides = array<i32>} : memref<1x128xf32, #tpu.memory_space<vmem>>, vector<1x128xf32>,
    %c0_24 = arith.constant 0 : index
    %c0_25 = arith.constant 0 : index
    %55 = vector.load %arg11[%c0_24, %c0_25] : memref<1x128xf32, #tpu.memory_space<vmem>>, vector<1x128xf32>
    %cst_26 = arith.constant dense<0.000000e+00> : vector<128xf32>
    %56 = vector.multi_reduction <add>, %24, %cst_26 [0] : vector<16x128xf32> to vector<128xf32>
    %57 = vector.shape_cast %56 : vector<128xf32> to vector<1x128xf32>
    %58 = arith.addf %55, %57 : vector<1x128xf32>
    %c0_27 = arith.constant 0 : index
    %c0_28 = arith.constant 0 : index
    %59 = vector.load %arg11[%c0_27, %c0_28] : memref<1x128xf32, #tpu.memory_space<vmem>>, vector<1x128xf32>
    tpu.vector_store %arg11[%c0_27, %c0_28], %58 {strides = array<i32>} : memref<1x128xf32, #tpu.memory_space<vmem>>, vector<1x128xf32>,
    %c0_i32_29 = arith.constant 0 : i32
    %60 = arith.cmpi eq, %arg0, %c0_i32_29 : i32
    %61 = arith.extui %60 : i1 to i32
    %c0_i32_30 = arith.constant 0 : i32
    %62 = arith.cmpi ne, %61, %c0_i32_30 : i32
    scf.if %62 {
      %c0_31 = arith.constant 0 : index
      %c0_32 = arith.constant 0 : index
      %63 = vector.load %arg11[%c0_31, %c0_32] : memref<1x128xf32, #tpu.memory_space<vmem>>, vector<1x128xf32>
      %cst_33 = arith.constant 0.000000e+00 : f32
      %64 = vector.broadcast %cst_33 : f32 to vector<1x128xf32>
      %65 = arith.cmpf oeq, %63, %64 : vector<1x128xf32>
      %cst_34 = arith.constant 1.000000e+00 : f32
      %66 = vector.broadcast %cst_34 : f32 to vector<1x128xf32>
      %67 = arith.divf %66, %63 : vector<1x128xf32>
      %cst_35 = arith.constant 0.000000e+00 : f32
      %68 = vector.broadcast %cst_35 : f32 to vector<1x128xf32>
      %69 = arith.select %65, %68, %67 : vector<1x128xi1>, vector<1x128xf32>
      %c0_36 = arith.constant 0 : index
      %c0_37 = arith.constant 0 : index
      %70 = vector.load %arg10[%c0_36, %c0_37] : memref<1x128xf32, #tpu.memory_space<vmem>>, vector<1x128xf32>
      %71 = arith.mulf %70, %69 : vector<1x128xf32>
      %c0_38 = arith.constant 0 : index
      %c0_39 = arith.constant 0 : index
      %72 = vector.load %arg9[%c0_38, %c0_39] : memref<1x128xf32, #tpu.memory_space<vmem>>, vector<1x128xf32>
      tpu.vector_store %arg9[%c0_38, %c0_39], %71 {strides = array<i32>} : memref<1x128xf32, #tpu.memory_space<vmem>>, vector<1x128xf32>,
      %c0_40 = arith.constant 0 : index
      %c0_41 = arith.constant 0 : index
      %73 = vector.load %arg7[%c0_40, %c0_41] : memref<1x128xf32, #tpu.memory_space<vmem>>, vector<1x128xf32>
      %74 = arith.mulf %71, %73 : vector<1x128xf32>
      %cst_42 = arith.constant dense<0.000000e+00> : vector<1xf32>
      %75 = vector.multi_reduction <add>, %74, %cst_42 [1] : vector<1x128xf32> to vector<1xf32>
      %76 = vector.shape_cast %75 : vector<1xf32> to vector<1x1xf32>
      %c0_43 = arith.constant 0 : index
      %c0_44 = arith.constant 0 : index
      %77 = vector.load %arg8[%c0_43, %c0_44] : memref<1x1xf32, #tpu.memory_space<vmem>>, vector<1x1xf32>
      tpu.vector_store %arg8[%c0_43, %c0_44], %76 {strides = array<i32>} : memref<1x1xf32, #tpu.memory_space<vmem>>, vector<1x1xf32>,
    } else {
    }
    return
  }
  func.func @transform_0(%arg0: i32) -> (i32, i32) {
    %c0_i32 = arith.constant 0 : i32
    %c0_i32_0 = arith.constant 0 : i32
    return %arg0, %c0_i32 : i32, i32
  }
  func.func @transform_1(%arg0: i32) -> (i32, i32) {
    %c0_i32 = arith.constant 0 : i32
    %c0_i32_0 = arith.constant 0 : i32
    return %arg0, %c0_i32 : i32, i32
  }
  func.func @transform_2(%arg0: i32) -> (i32, i32) {
    %c0_i32 = arith.constant 0 : i32
    %c0_i32_0 = arith.constant 0 : i32
    return %arg0, %c0_i32 : i32, i32
  }
  func.func @transform_3(%arg0: i32) -> (i32, i32) {
    %c0_i32 = arith.constant 0 : i32
    %c0_i32_0 = arith.constant 0 : i32
    %c0_i32_1 = arith.constant 0 : i32
    return %c0_i32, %c0_i32_0 : i32, i32
  }
  func.func @transform_4(%arg0: i32) -> (i32, i32) {
    %c0_i32 = arith.constant 0 : i32
    %c0_i32_0 = arith.constant 0 : i32
    %c0_i32_1 = arith.constant 0 : i32
    return %c0_i32, %c0_i32_0 : i32, i32
  }
  func.func @transform_5(%arg0: i32) -> (i32, i32) {
    %c0_i32 = arith.constant 0 : i32
    %c0_i32_0 = arith.constant 0 : i32
    %c0_i32_1 = arith.constant 0 : i32
    return %c0_i32, %c0_i32_0 : i32, i32
  }
  func.func @transform_6(%arg0: i32) -> (i32, i32) {
    %c0_i32 = arith.constant 0 : i32
    %c0_i32_0 = arith.constant 0 : i32
    %c0_i32_1 = arith.constant 0 : i32
    return %c0_i32, %c0_i32_0 : i32, i32
  }
  func.func @transform_7(%arg0: i32) -> (i32, i32) {
    %c0_i32 = arith.constant 0 : i32
    %c0_i32_0 = arith.constant 0 : i32
    %c0_i32_1 = arith.constant 0 : i32
    return %c0_i32, %c0_i32_0 : i32, i32
  }
  func.func @transform_8(%arg0: i32) -> (i32, i32) {
    %c0_i32 = arith.constant 0 : i32
    %c0_i32_0 = arith.constant 0 : i32
    %c0_i32_1 = arith.constant 0 : i32
    return %c0_i32, %c0_i32_0 : i32, i32
  }
}

</mosaic_0001>

<llo_original>
// kernel: multitask_loss.1
$region0: #{multitask_loss.1}
  #allocation0 [shape = 'u32[]', space=smem, size = 0x4, offset = 0x4, fixed_abs, tag = 'smem constant byte address 0x4 - core index']
  #allocation1 [shape = 'u32[144,128]{1,0:T(1,128)}', space=vmem, size = 0x12000, scoped, tag = 'internal scratch']
  #allocation2 [shape = 'f32[1,128]{1,0:T(1,128)}', space=vmem, size = 0x200, scoped, tag = 'scratch operand']
  #allocation3 [shape = 'f32[1,128]{1,0:T(1,128)}', space=vmem, size = 0x200, scoped, tag = 'scratch operand']
  %s0 = inlined_call_operand.vmem [shape: f32[16,32], index: 0, kind: input, shape index: {}]
  %s1 = inlined_call_operand.vmem [shape: s32[16,1], index: 1, kind: input, shape index: {}]
  %s2 = inlined_call_operand.vmem [shape: s32[16,1], index: 2, kind: input, shape index: {}]
  %s3 = inlined_call_operand.vmem [shape: f32[32,128], index: 3, kind: input, shape index: {}]
  %s4 = inlined_call_operand.vmem [shape: f32[128,128], index: 4, kind: input, shape index: {}]
  %s5 = inlined_call_operand.vmem [shape: f32[1,128], index: 5, kind: input, shape index: {}]
  %s6 = inlined_call_operand.vmem [shape: f32[1,128], index: 6, kind: input, shape index: {}]
  %s7 = inlined_call_operand.hbm [shape: f32[1,1], index: 7, kind: output, shape index: {0}]
  %s8 = inlined_call_operand.vmem [shape: f32[1,128], index: 8, kind: output, shape index: {1}]
  %9 = xla_tuple %s7, %s8
  %s10 = sld [smem:[#allocation0]]
  $region54: #{multitask_loss.1} parent=0
    _
  %s12 = ssub.s32 1, %s10
  %s13 = scalar_select 0, %s12, %s10
  $region1: #{multitask_loss.1} parent=0
    #allocation4 [shape = 'u8[512]{0}', space=vmem, size = 0x400, scoped, tag = 'output window, operand 0, single buffered']
    #allocation5 [shape = 's32[1]{0}', space=sflag, size = 0x4, scoped, tag = 'scoped memory for multitask_loss.1']
    %14 = vsyncpa [#allocation5], 0
    // Predicated region
    $region2: #{multitask_loss.1} parent=1 // pred_check
      _
    $region3: #{multitask_loss.1} parent=1 // pred_check_branch
      %16 = sbr.rel (0) target = $region5
    $region4: #{multitask_loss.1} parent=1 // pred_region
      _
    $region5: #{multitask_loss.1} parent=1 // pred_fallthru
      _
    // Predicated region
    $region6: #{multitask_loss.1} parent=1 // pred_check
      _
    $region7: #{multitask_loss.1} parent=1 // pred_check_branch
      %18 = sbr.rel (0) target = $region9
    $region8: #{multitask_loss.1} parent=1 // pred_region
      _
    $region9: #{multitask_loss.1} parent=1 // pred_fallthru
      _
    // Predicated region
    $region10: #{multitask_loss.1} parent=1 // pred_check
      _
    $region11: #{multitask_loss.1} parent=1 // pred_check_branch
      %20 = sbr.rel (0) target = $region13
    $region12: #{multitask_loss.1} parent=1 // pred_region
      _
    $region13: #{multitask_loss.1} parent=1 // pred_fallthru
      _
    // Predicated region
    $region14: #{multitask_loss.1} parent=1 // pred_check
      _
    $region15: #{multitask_loss.1} parent=1 // pred_check_branch
      %22 = sbr.rel (0) target = $region17
    $region16: #{multitask_loss.1} parent=1 // pred_region
      _
    $region17: #{multitask_loss.1} parent=1 // pred_fallthru
      _
    // Predicated region
    $region18: #{multitask_loss.1} parent=1 // pred_check
      _
    $region19: #{multitask_loss.1} parent=1 // pred_check_branch
      %24 = sbr.rel (0) target = $region21
    $region20: #{multitask_loss.1} parent=1 // pred_region
      _
    $region21: #{multitask_loss.1} parent=1 // pred_fallthru
      _
    // Predicated region
    $region22: #{multitask_loss.1} parent=1 // pred_check
      _
    $region23: #{multitask_loss.1} parent=1 // pred_check_branch
      %26 = sbr.rel (0) target = $region25
    $region24: #{multitask_loss.1} parent=1 // pred_region
      _
    $region25: #{multitask_loss.1} parent=1 // pred_fallthru
      _
    // Predicated region
    $region26: #{multitask_loss.1} parent=1 // pred_check
      _
    $region27: #{multitask_loss.1} parent=1 // pred_check_branch
      %28 = sbr.rel (0) target = $region29
    $region28: #{multitask_loss.1} parent=1 // pred_region
      _
    $region29: #{multitask_loss.1} parent=1 // pred_fallthru
      _
    %p29 = scmp.eq.s32.totalorder 0, 0
    // Predicated region
    $region30: #{multitask_loss.1} parent=1 // pred_check
      %p30 = pneg %p29
    $region31: #{multitask_loss.1} parent=1 // pred_check_branch
      %32 = sbr.rel (%p30) target = $region33
    $region32: #{multitask_loss.1} parent=1 // pred_region
      %33 = vst [vmem:[#allocation2] sm:$0x1] 0.0
      %34 = vst [vmem:[#allocation3] sm:$0x1] 0.0
    $region33: #{multitask_loss.1} parent=1 // pred_fallthru
      _
    %v35 = vld [vmem:[%s1] sm:$0xff]
    %v36 = vld [vmem:[%s1 + $0x8] sm:$0xff]
    %v37 = vld [vmem:[%s2] sm:$0xff]
    %v38 = vld [vmem:[%s2 + $0x8] sm:$0xff]
    %vm39 = vcmp.ge.s32.totalorder %v35, 0
    %vm40 = vcmp.ge.s32.totalorder %v36, 0
    %v41 = vsel %vm39, 1, 0
    %v42 = vsel %vm40, 1, 0
    %v43 = vcvt.s32.f32 %v41
    %v44 = vcvt.s32.f32 %v42
    %v45 = vsel %vm39, %v35, 0
    %v46 = vsel %vm40, %v36, 0
    %v47 = vlaneseq
    %v48 = vand.u32 %v47, 127
    %49 = vset.pattern.permute.xlu0 0
    %50 = vperm.xlu0 %49, %v45
    %v51 = vpop.permute.xlu0 %50
    %52 = vset.pattern.permute.xlu0 0
    %53 = vperm.xlu0 %52, %v46
    %v54 = vpop.permute.xlu0 %53
    %vm55 = vcmp.eq.s32.totalorder %v48, %v51
    %vm56 = vcmp.eq.s32.totalorder %v48, %v54
    %v57 = vsel %vm55, 1, 0
    %v58 = vsel %vm56, 1, 0
    %v59 = vcvt.s32.f32 %v57
    %v60 = vcvt.s32.f32 %v58
    %62 = vset.pattern.permute.xlu0 0
    %63 = vperm.xlu0 %62, %v43
    %v64 = vpop.permute.xlu0 %63
    %67 = vset.pattern.permute.xlu0 0
    %68 = vperm.xlu0 %67, %v44
    %v69 = vpop.permute.xlu0 %68
    %v71 = vmul.f32 %v59, %v64
    %v72 = vmul.f32 %v60, %v69
    %73 = vset.pattern.permute.xlu0 0
    %74 = vperm.xlu0 %73, %v37
    %v75 = vpop.permute.xlu0 %74
    %76 = vset.pattern.permute.xlu0 0
    %77 = vperm.xlu0 %76, %v38
    %v78 = vpop.permute.xlu0 %77
    %vm79 = vcmp.eq.s32.totalorder %v48, %v75
    %vm80 = vcmp.eq.s32.totalorder %v48, %v78
    %v81 = vsel %vm79, 1, 0
    %v82 = vsel %vm80, 1, 0
    %v83 = vcvt.s32.f32 %v81
    %v84 = vcvt.s32.f32 %v82
    %v85 = vld [vmem:[%s0] sm:$0xff]
    %v86 = vld [vmem:[%s0 + $0x8] sm:$0xff]
    %v87 = vld [vmem:[%s3] sm:$0xff]
    %v88 = vld [vmem:[%s3 + $0x8] sm:$0xff]
    %v89 = vld [vmem:[%s3 + $0x10] sm:$0xff]
    %v90 = vld [vmem:[%s3 + $0x18] sm:$0xff]
    %v91 = vld [vmem:[%s4] sm:$0xff]
    %v92 = vld [vmem:[%s4 + $0x8] sm:$0xff]
    %v93 = vld [vmem:[%s4 + $0x10] sm:$0xff]
    %v94 = vld [vmem:[%s4 + $0x18] sm:$0xff]
    %v95 = vld [vmem:[%s4 + $0x20] sm:$0xff]
    %v96 = vld [vmem:[%s4 + $0x28] sm:$0xff]
    %v97 = vld [vmem:[%s4 + $0x30] sm:$0xff]
    %v98 = vld [vmem:[%s4 + $0x38] sm:$0xff]
    %v99 = vld [vmem:[%s4 + $0x40] sm:$0xff]
    %v100 = vld [vmem:[%s4 + $0x48] sm:$0xff]
    %v101 = vld [vmem:[%s4 + $0x50] sm:$0xff]
    %v102 = vld [vmem:[%s4 + $0x58] sm:$0xff]
    %v103 = vld [vmem:[%s4 + $0x60] sm:$0xff]
    %v104 = vld [vmem:[%s4 + $0x68] sm:$0xff]
    %v105 = vld [vmem:[%s4 + $0x70] sm:$0xff]
    %v106 = vld [vmem:[%s4 + $0x78] sm:$0xff]
    %107 = vmatprep.subr.mxu0 0.0
    %108 = vmatpush1.msra.mxu0 %v91
    %109 = vmatprep.subr.mxu0 0.0
    %110 = vmatpush1.msra.mxu0 %v92
    %111 = vmatprep.subr.mxu0 0.0
    %112 = vmatpush1.msra.mxu0 %v93
    %113 = vmatprep.subr.mxu0 0.0
    %114 = vmatpush1.msra.mxu0 %v94
    %115 = vmatprep.subr.mxu0 0.0
    %116 = vmatpush1.msra.mxu0 %v95
    %117 = vmatprep.subr.mxu0 0.0
    %118 = vmatpush1.msra.mxu0 %v96
    %119 = vmatprep.subr.mxu0 0.0
    %120 = vmatpush1.msra.mxu0 %v97
    %121 = vmatprep.subr.mxu0 0.0
    %122 = vmatpush1.msra.mxu0 %v98
    %123 = vmatprep.subr.mxu0 0.0
    %124 = vmatpush1.msra.mxu0 %v99
    %125 = vmatprep.subr.mxu0 0.0
    %126 = vmatpush1.msra.mxu0 %v100
    %127 = vmatprep.subr.mxu0 0.0
    %128 = vmatpush1.msra.mxu0 %v101
    %129 = vmatprep.subr.mxu0 0.0
    %130 = vmatpush1.msra.mxu0 %v102
    %131 = vmatprep.subr.mxu0 0.0
    %132 = vmatpush1.msra.mxu0 %v103
    %133 = vmatprep.subr.mxu0 0.0
    %134 = vmatpush1.msra.mxu0 %v104
    %135 = vmatprep.subr.mxu0 0.0
    %136 = vmatpush1.msra.mxu0 %v105
    %137 = vmatprep.subr.mxu0 0.0
    %138 = vmatpush1.msra.mxu0 %v106
    %139 = vmatprep.subr.mxu0 0.0
    %140 = vmatpush1.msra.mxu0 0.0
    %141 = vmatprep.subr.mxu0 0.0
    %142 = vmatpush1.msra.mxu0 0.0
    %143 = vmatprep.subr.mxu0 0.0
    %144 = vmatpush1.msra.mxu0 0.0
    %145 = vmatprep.subr.mxu0 0.0
    %146 = vmatpush1.msra.mxu0 0.0
    %147 = vmatprep.subr.mxu0 0.0
    %148 = vmatpush1.msra.mxu0 0.0
    %149 = vmatprep.subr.mxu0 0.0
    %150 = vmatpush1.msra.mxu0 0.0
    %151 = vmatprep.subr.mxu0 0.0
    %152 = vmatpush1.msra.mxu0 0.0
    %153 = vmatprep.subr.mxu0 0.0
    %154 = vmatpush1.msra.mxu0 0.0
    %155 = vmatprep.subr.mxu0 0.0
    %156 = vmatpush1.msra.mxu0 0.0
    %157 = vmatprep.subr.mxu0 0.0
    %158 = vmatpush1.msra.mxu0 0.0
    %159 = vmatprep.subr.mxu0 0.0
    %160 = vmatpush1.msra.mxu0 0.0
    %161 = vmatprep.subr.mxu0 0.0
    %162 = vmatpush1.msra.mxu0 0.0
    %163 = vmatprep.subr.mxu0 0.0
    %164 = vmatpush1.msra.mxu0 0.0
    %165 = vmatprep.subr.mxu0 0.0
    %166 = vmatpush1.msra.mxu0 0.0
    %167 = vmatprep.subr.mxu0 0.0
    %168 = vmatpush1.msra.mxu0 0.0
    %169 = vmatprep.subr.mxu0 0.0
    %170 = vmatpush1.msra.mxu0 0.0
    %171 = vmatprep.mubr.f32.mxu0 0.0
    %172 = vmatmul.mubr.f32.gmra.mrb[0].mxu0 %v83
    %v173 = vpop.f32.mrb[0].mxu0
    %v174 = vadd.f32 0.0, %v173
    %v175 = vpop.f32.mrb[0].mxu0
    %176 = vmatprep.mubr.f32.mxu0 0.0
    %177 = vmatmul.mubr.f32.gmra.mrb[0].mxu0 %v84
    %v178 = vpop.f32.mrb[0].mxu0
    %v179 = vadd.f32 0.0, %v178
    %v180 = vpop.f32.mrb[0].mxu0
    %181 = vdwg.mxu0
    %vm182 = vcmask 261120
    %v184 = vsel %vm182, %v85, 0
    %v187 = vsel %vm182, %v86, 0
    %189 = vmatprep.subr.mxu0 0.0
    %190 = vmatpush1.msra.mxu0 %v87
    %191 = vmatprep.subr.mxu0 0.0
    %192 = vmatpush1.msra.mxu0 %v88
    %193 = vmatprep.subr.mxu0 0.0
    %194 = vmatpush1.msra.mxu0 %v89
    %195 = vmatprep.subr.mxu0 0.0
    %196 = vmatpush1.msra.mxu0 %v90
    %197 = vmatprep.subr.mxu0 0.0
    %198 = vmatpush1.msra.mxu0 0.0
    %199 = vmatprep.subr.mxu0 0.0
    %200 = vmatpush1.msra.mxu0 0.0
    %201 = vmatprep.subr.mxu0 0.0
    %202 = vmatpush1.msra.mxu0 0.0
    %203 = vmatprep.subr.mxu0 0.0
    %204 = vmatpush1.msra.mxu0 0.0
    %205 = vmatprep.subr.mxu0 0.0
    %206 = vmatpush1.msra.mxu0 0.0
    %207 = vmatprep.subr.mxu0 0.0
    %208 = vmatpush1.msra.mxu0 0.0
    %209 = vmatprep.subr.mxu0 0.0
    %210 = vmatpush1.msra.mxu0 0.0
    %211 = vmatprep.subr.mxu0 0.0
    %212 = vmatpush1.msra.mxu0 0.0
    %213 = vmatprep.subr.mxu0 0.0
    %214 = vmatpush1.msra.mxu0 0.0
    %215 = vmatprep.subr.mxu0 0.0
    %216 = vmatpush1.msra.mxu0 0.0
    %217 = vmatprep.subr.mxu0 0.0
    %218 = vmatpush1.msra.mxu0 0.0
    %219 = vmatprep.subr.mxu0 0.0
    %220 = vmatpush1.msra.mxu0 0.0
    %221 = vmatprep.subr.mxu0 0.0
    %222 = vmatpush1.msra.mxu0 0.0
    %223 = vmatprep.subr.mxu0 0.0
    %224 = vmatpush1.msra.mxu0 0.0
    %225 = vmatprep.subr.mxu0 0.0
    %226 = vmatpush1.msra.mxu0 0.0
    %227 = vmatprep.subr.mxu0 0.0
    %228 = vmatpush1.msra.mxu0 0.0
    %229 = vmatprep.subr.mxu0 0.0
    %230 = vmatpush1.msra.mxu0 0.0
    %231 = vmatprep.subr.mxu0 0.0
    %232 = vmatpush1.msra.mxu0 0.0
    %233 = vmatprep.subr.mxu0 0.0
    %234 = vmatpush1.msra.mxu0 0.0
    %235 = vmatprep.subr.mxu0 0.0
    %236 = vmatpush1.msra.mxu0 0.0
    %237 = vmatprep.subr.mxu0 0.0
    %238 = vmatpush1.msra.mxu0 0.0
    %239 = vmatprep.subr.mxu0 0.0
    %240 = vmatpush1.msra.mxu0 0.0
    %241 = vmatprep.subr.mxu0 0.0
    %242 = vmatpush1.msra.mxu0 0.0
    %243 = vmatprep.subr.mxu0 0.0
    %244 = vmatpush1.msra.mxu0 0.0
    %245 = vmatprep.subr.mxu0 0.0
    %246 = vmatpush1.msra.mxu0 0.0
    %247 = vmatprep.subr.mxu0 0.0
    %248 = vmatpush1.msra.mxu0 0.0
    %249 = vmatprep.subr.mxu0 0.0
    %250 = vmatpush1.msra.mxu0 0.0
    %251 = vmatprep.subr.mxu0 0.0
    %252 = vmatpush1.msra.mxu0 0.0
    %253 = vmatprep.mubr.f32.mxu0 0.0
    %254 = vmatmul.mubr.f32.gmra.mrb[0].mxu0 %v184
    %v255 = vpop.f32.mrb[0].mxu0
    %v256 = vadd.f32 %v174, %v255
    %v257 = vpop.f32.mrb[0].mxu0
    %258 = vmatprep.mubr.f32.mxu0 0.0
    %259 = vmatmul.mubr.f32.gmra.mrb[0].mxu0 %v187
    %v260 = vpop.f32.mrb[0].mxu0
    %v261 = vadd.f32 %v179, %v260
    %v262 = vpop.f32.mrb[0].mxu0
    %263 = vdwg.mxu0
    %v264 = vld [vmem:[%s5] sm:$0x1]
    %v266 = vlaneseq
    %v267 = vshrl.u32 %v266, 7
    %v268 = vsub.s32 0, %v267
    %v269 = vrot.slane %v264, %v268
    %v271 = vadd.f32 %v256, %v269
    %v272 = vadd.f32 %v261, %v269
    %273 = vmax.xlane.f32.xlu0 %v271
    %v274 = vpop.xlane.xlu0 %273
    %275 = vmax.xlane.f32.xlu0 %v272
    %v276 = vpop.xlane.xlu0 %275
    %v277 = vsub.f32 %v271, %v274
    %v278 = vsub.f32 %v272, %v276
    %v279 = vmul.f32 %v277, 1.442695
    %v280 = vpow.pop %v279
    %v281 = vmul.f32 %v278, 1.442695
    %v282 = vpow.pop %v281
    %283 = vadd.xlane.f32.xlu0 %v280
    %v284 = vpop.xlane.xlu0 %283
    %285 = vadd.xlane.f32.xlu0 %v282
    %v286 = vpop.xlane.xlu0 %285
    %v287 = vlog2.pop %v284
    %v288 = vmul.f32 %v287, 0.6931472
    %v289 = vlog2.pop %v286
    %v290 = vmul.f32 %v289, 0.6931472
    %v291 = vadd.f32 %v274, %v288
    %v292 = vadd.f32 %v276, %v290
    %v293 = vmul.f32 %v271, %v71
    %v294 = vmul.f32 %v272, %v72
    %295 = vadd.xlane.f32.xlu0 %v293
    %v296 = vpop.xlane.xlu0 %295
    %297 = vadd.xlane.f32.xlu0 %v294
    %v298 = vpop.xlane.xlu0 %297
    %v299 = vsub.f32 %v291, %v296
    %v300 = vsub.f32 %v292, %v298
    %v301 = vmul.f32 %v299, %v43
    %v302 = vmul.f32 %v300, %v44
    %v303 = vld [vmem:[#allocation2] sm:$0x1]
    %305 = vset.pattern.permute.xlu0 0
    %306 = vperm.xlu0 %305, %v301
    %v307 = vpop.permute.xlu0 %306
    %310 = vset.pattern.permute.xlu0 0
    %311 = vperm.xlu0 %310, %v302
    %v312 = vpop.permute.xlu0 %311
    %v314 = vmul.f32 %v307, %v83
    %v315 = vmul.f32 %v312, %v84
    %v316 = vadd.f32 %v314, %v315
    %v317 = vrot.slane %v316, 4
    %v318 = vadd.f32 %v316, %v317
    %v319 = vrot.slane %v318, 2
    %v320 = vadd.f32 %v318, %v319
    %v321 = vrot.slane %v320, 1
    %v322 = vadd.f32 %v320, %v321
    %v323 = vadd.f32 %v303, %v322
    %324 = vst [vmem:[#allocation2] sm:$0x1] %v323
    %v325 = vld [vmem:[#allocation3] sm:$0x1]
    %v326 = vadd.f32 %v83, %v84
    %v327 = vrot.slane %v326, 4
    %v328 = vadd.f32 %v326, %v327
    %v329 = vrot.slane %v328, 2
    %v330 = vadd.f32 %v328, %v329
    %v331 = vrot.slane %v330, 1
    %v332 = vadd.f32 %v330, %v331
    %v333 = vadd.f32 %v325, %v332
    %334 = vst [vmem:[#allocation3] sm:$0x1] %v333
    // Predicated region
    $region34: #{multitask_loss.1} parent=1 // pred_check
      %p335 = pneg %p29
    $region35: #{multitask_loss.1} parent=1 // pred_check_branch
      %337 = sbr.rel (%p335) target = $region37
    $region36: #{multitask_loss.1} parent=1 // pred_region
      %v338 = vld [vmem:[#allocation3] sm:$0x1]
      %vm339 = vcmp.eq.f32.partialorder %v338, 0.0
      %v340 = vrcp.pop %v338
      %v341 = vmul.f32 1.0, %v340
      %v342 = vsel %vm339, 0.0, %v341
      %v343 = vld [vmem:[#allocation2] sm:$0x1]
      %v344 = vmul.f32 %v343, %v342
      %345 = vst [vmem:[%s8] sm:$0x1] %v344
      %v346 = vld [vmem:[%s6] sm:$0x1]
      %v347 = vmul.f32 %v344, %v346
      %vm348 = vcmask 1040384
      %v349 = vsel %vm348, %v347, 0.0
      %350 = vadd.xlane.f32.xlu0 %v349
      %v351 = vpop.xlane.xlu0 %350
      %vm352 = vcmask 0
      %353 = vst.msk [vmem:[#allocation4] sm:$0x1] %vm352, %v351
    $region37: #{multitask_loss.1} parent=1 // pred_fallthru
      _
    // Predicated region
    $region38: #{multitask_loss.1} parent=1 // pred_check
      _
    $region39: #{multitask_loss.1} parent=1 // pred_check_branch
      %355 = sbr.rel (0) target = $region41
    $region40: #{multitask_loss.1} parent=1 // pred_region
      %s357 = ssub.s32 16, 16
      %358 = vsyncadd [#allocation5], %s357
      %s360 = sshll.u32 [#allocation4], 4
      %s361 = int_to_ptr.vmem [resolvable:$true] %s360
      %363 = dma.vmem_to_hbm [thread:$0]  %s361, 16, %s7, [#allocation5]
    $region41: #{multitask_loss.1} parent=1 // pred_fallthru
      _
    // Predicated region
    $region42: #{multitask_loss.1} parent=1 // pred_check
      _
    $region43: #{multitask_loss.1} parent=1 // pred_check_branch
      %365 = sbr.rel (0) target = $region45
    $region44: #{multitask_loss.1} parent=1 // pred_region
      _
    $region45: #{multitask_loss.1} parent=1 // pred_fallthru
      _
    // Predicated region
    $region46: #{multitask_loss.1} parent=1 // pred_check
      _
    $region47: #{multitask_loss.1} parent=1 // pred_check_branch
      %367 = sbr.rel (0) target = $region49
    $region48: #{multitask_loss.1} parent=1 // pred_region
      %368 = dma.done [#allocation5], 16
    $region49: #{multitask_loss.1} parent=1 // pred_fallthru
      _
    // Predicated region
    $region50: #{multitask_loss.1} parent=1 // pred_check
      _
    $region51: #{multitask_loss.1} parent=1 // pred_check_branch
      %370 = sbr.rel (0) target = $region53
    $region52: #{multitask_loss.1} parent=1 // pred_region
      _
    $region53: #{multitask_loss.1} parent=1 // pred_fallthru
      _
    %371 = vsyncpa [#allocation5], 1

</llo_original>
